<compile_context>
chip_gen: v7x
topology: tpu7x:2x2x1
jax: 0.10.0
libtpu: 0.0.40
codegen_flags: <defaults>
</compile_context>

<pallas_src>
import math

import jax
import jax.numpy as jnp
from jax.experimental import pallas as pl
from jax.experimental.pallas import tpu as pltpu

DIM_EMBED = 32
VOCAB_SIZE = len(range(32, 127))      # 95
VOCAB_PAD = 128                       # vocab zero-padded to a full 128-lane width
PACK = 128 // DIM_EMBED               # 4 tokens packed per 128-lane output row
SCALE = DIM_EMBED ** 0.5


def _make_embed_kernel(tile_packed: int, chunk: int):
    """Kernel over one (tile_packed, 128) output tile; loops over `chunk`-row sub-strips."""
    n_chunks = tile_packed // chunk

    def kernel(ids_ref, bd_ref, o_ref):
        # ids_ref: (tile_packed, PACK) int32 token ids (4 tokens per packed row)
        # bd_ref:  (PACK*VOCAB_PAD, PACK*DIM_EMBED) = (512, 128) block-diagonal table,
        #          sqrt(DIM_EMBED) already folded in, VMEM-resident across grid steps
        # o_ref:   (tile_packed, 128) == row-major view of (PACK*tile_packed, 32)
        table = bd_ref[...]
        vi = jax.lax.broadcasted_iota(jnp.int32, (chunk, VOCAB_PAD), 1)

        def body(c, carry):
            start = pl.multiple_of(c * chunk, chunk)
            ids = ids_ref[pl.ds(start, chunk), :]                      # (chunk, PACK)
            # (chunk, PACK*VOCAB_PAD) one-hot: column j*128 + v is hot iff ids[:, j] == v.
            onehot = jnp.concatenate(
                [(ids[:, j:j + 1] == vi).astype(table.dtype) for j in range(PACK)],
                axis=1)
            # Block-diagonal table places slot j's embedding into output lanes [32j, 32j+32),
            # so the MXU result is already the lane-dense packed output tile.
            emb = jnp.dot(onehot, table, preferred_element_type=jnp.float32)
            o_ref[pl.ds(start, chunk), :] = emb.astype(o_ref.dtype)
            return carry

        jax.lax.fori_loop(0, n_chunks, body, 0, unroll=True)

    return kernel


def _round_up(x, m):
    return -(-x // m) * m


def embedder_forward(x_ids, table, *, tb=4096):
    """x_ids: integer token ids, any shape. table: (VOCAB_SIZE, DIM_EMBED). -> (*x_ids, D)."""
    orig_shape = x_ids.shape
    n = math.prod(orig_shape) if orig_shape else 1

    # tb = tokens per grid step; multiple of PACK*8 = 32 so the packed tile sublane dim % 8 == 0.
    tb = max(32, (int(tb) // 32) * 32)
    tb = min(tb, _round_up(n, 32))            # don't over-pad tiny inputs
    n_pad = _round_up(n, tb)

    tile_packed = tb // PACK                  # packed rows per grid step (multiple of 8)
    # Sub-chunk of packed rows per inner iteration: keeps the one-hot strip (<=128x512 f32
    # = 256 KiB) small instead of materializing a tb-sized intermediate.
    chunk = max(c for c in (8, 16, 32, 64, 128) if c <= tile_packed and tile_packed % c == 0)

    # Token ids, flattened & packed 4-per-row; pad with id 0 (valid row, sliced off below).
    ids_flat = jnp.pad(x_ids.reshape(-1).astype(jnp.int32), (0, n_pad - n))
    ids_packed = ids_flat.reshape(n_pad // PACK, PACK)

    # Block-diagonal table (512, 128): block j maps vocab slot j -> output lanes [32j, 32j+32).
    # sqrt(DIM_EMBED) is folded in here (one-time; in a real model hoist/cache this).
    table_scaled = (table * SCALE).astype(table.dtype)
    bd = jnp.zeros((PACK * VOCAB_PAD, PACK * DIM_EMBED), table.dtype)
    for j in range(PACK):
        bd = bd.at[j * VOCAB_PAD: j * VOCAB_PAD + VOCAB_SIZE,
                   j * DIM_EMBED: (j + 1) * DIM_EMBED].set(table_scaled)

    grid = (n_pad // tb,)
    out_packed = pl.pallas_call(
        _make_embed_kernel(tile_packed, chunk),
        out_shape=jax.ShapeDtypeStruct((n_pad // PACK, PACK * DIM_EMBED), table.dtype),
        grid=grid,
        in_specs=[
            pl.BlockSpec((tile_packed, PACK), lambda i: (i, 0)),                    # ids
            pl.BlockSpec((PACK * VOCAB_PAD, PACK * DIM_EMBED), lambda i: (0, 0)),   # table, resident
        ],
        out_specs=pl.BlockSpec((tile_packed, PACK * DIM_EMBED), lambda i: (i, 0)),  # lane-dense
        compiler_params=pltpu.CompilerParams(
            dimension_semantics=("parallel",),
        ),
    )(ids_packed, bd)

    # (n_pad//4, 128) row-major is exactly (n_pad, 32); drop padding, restore leading shape.
    return out_packed.reshape(n_pad, DIM_EMBED)[:n].reshape(*orig_shape, DIM_EMBED)


if __name__ == "__main__":
    key = jax.random.PRNGKey(0)
    k_tab, k_ids = jax.random.split(key)

    batch, seq = 2, 12
    # Deterministic "nn.Embedding" weight and integer token-id inputs.
    table = jax.random.normal(k_tab, (VOCAB_SIZE, DIM_EMBED), dtype=jnp.float32)
    x = jax.random.randint(k_ids, (batch, seq), 0, VOCAB_SIZE, dtype=jnp.int32)

    out = embedder_forward(x, table)
    out = jax.block_until_ready(out)

    # Reference: plain JAX gather + scale (matches PyTorch lookup(x) * DIM_EMBED**0.5).
    ref = table[x] * SCALE
    assert out.shape == (batch, seq, DIM_EMBED)
    assert jnp.allclose(out, ref, atol=1e-5, rtol=1e-5)
    print("KERNEL_OK")
</pallas_src>

<mosaic_0001>
module attributes {stable_mosaic.version = 11 : i64} {
  func.func @kernel(%arg0: i32, %arg1: memref<8x4xi32, #tpu.memory_space<vmem>>, %arg2: memref<512x128xf32, #tpu.memory_space<vmem>>, %arg3: memref<8x128xf32, #tpu.memory_space<vmem>>) attributes {dimension_semantics = [#tpu.dimension_semantics<parallel>], iteration_bounds = array<i64: 1>, scalar_prefetch = 0 : i64, scratch_operands = 0 : i64, tpu.core_type = #tpu.core_type<tc>, window_params = [{transform_indices = @transform_0, window_bounds = array<i64: 8, 4>}, {pipeline_mode = #tpu.pipeline_mode<synchronous>, transform_indices = @transform_1, window_bounds = array<i64: 512, 128>}, {transform_indices = @transform_2, window_bounds = array<i64: 8, 128>}]} {
    %c0 = arith.constant 0 : index
    %c0_0 = arith.constant 0 : index
    %0 = vector.load %arg2[%c0, %c0_0] : memref<512x128xf32, #tpu.memory_space<vmem>>, vector<512x128xf32>
    %1 = tpu.iota {dimensions = array<i32: 1>} : vector<8x128xi32>
    %c0_i32 = arith.constant 0 : i32
    %c8_i32 = arith.constant 8 : i32
    %2 = arith.muli %c0_i32, %c8_i32 : i32
    %3 = tpu.assume_multiple %2, 8 : i32
    %4 = arith.index_cast %3 : i32 to index
    %c0_1 = arith.constant 0 : index
    %5 = vector.load %arg1[%4, %c0_1] : memref<8x4xi32, #tpu.memory_space<vmem>>, vector<8x4xi32>
    %6 = vector.extract_strided_slice %5 {offsets = [0, 0], sizes = [8, 1], strides = [1, 1]} : vector<8x4xi32> to vector<8x1xi32>
    %7 = vector.broadcast %6 : vector<8x1xi32> to vector<8x128xi32>
    %8 = arith.cmpi eq, %7, %1 : vector<8x128xi32>
    %9 = arith.extui %8 : vector<8x128xi1> to vector<8x128xi32>
    %10 = arith.sitofp %9 : vector<8x128xi32> to vector<8x128xf32>
    %11 = vector.extract_strided_slice %5 {offsets = [0, 1], sizes = [8, 1], strides = [1, 1]} : vector<8x4xi32> to vector<8x1xi32>
    %12 = vector.broadcast %11 : vector<8x1xi32> to vector<8x128xi32>
    %13 = arith.cmpi eq, %12, %1 : vector<8x128xi32>
    %14 = arith.extui %13 : vector<8x128xi1> to vector<8x128xi32>
    %15 = arith.sitofp %14 : vector<8x128xi32> to vector<8x128xf32>
    %16 = vector.extract_strided_slice %5 {offsets = [0, 2], sizes = [8, 1], strides = [1, 1]} : vector<8x4xi32> to vector<8x1xi32>
    %17 = vector.broadcast %16 : vector<8x1xi32> to vector<8x128xi32>
    %18 = arith.cmpi eq, %17, %1 : vector<8x128xi32>
    %19 = arith.extui %18 : vector<8x128xi1> to vector<8x128xi32>
    %20 = arith.sitofp %19 : vector<8x128xi32> to vector<8x128xf32>
    %21 = vector.extract_strided_slice %5 {offsets = [0, 3], sizes = [8, 1], strides = [1, 1]} : vector<8x4xi32> to vector<8x1xi32>
    %22 = vector.broadcast %21 : vector<8x1xi32> to vector<8x128xi32>
    %23 = arith.cmpi eq, %22, %1 : vector<8x128xi32>
    %24 = arith.extui %23 : vector<8x128xi1> to vector<8x128xi32>
    %25 = arith.sitofp %24 : vector<8x128xi32> to vector<8x128xf32>
    %26 = tpu.concatenate %10, %15, %20, %25 in 1 : vector<8x128xf32>, vector<8x128xf32>, vector<8x128xf32>, vector<8x128xf32> -> vector<8x512xf32>
    %cst = arith.constant dense<0.000000e+00> : vector<8x128xf32>
    %27 = tpu.matmul %26, %0, %cst {dimension_numbers = #tpu.dot_dimension_numbers<[1], [0], [0], [1], [0, 0, 1, 1], [], []>} : vector<8x512xf32>, vector<512x128xf32>, vector<8x128xf32> -> vector<8x128xf32>
    %28 = arith.index_cast %3 : i32 to index
    %c0_2 = arith.constant 0 : index
    %29 = vector.load %arg3[%28, %c0_2] : memref<8x128xf32, #tpu.memory_space<vmem>>, vector<8x128xf32>
    tpu.vector_store %arg3[%28, %c0_2], %27 {strides = array<i32>} : memref<8x128xf32, #tpu.memory_space<vmem>>, vector<8x128xf32>,
    %c1_i32 = arith.constant 1 : i32
    return
  }
  func.func @transform_0(%arg0: i32) -> (i32, i32) {
    %c0_i32 = arith.constant 0 : i32
    %c0_i32_0 = arith.constant 0 : i32
    return %arg0, %c0_i32 : i32, i32
  }
  func.func @transform_1(%arg0: i32) -> (i32, i32) {
    %c0_i32 = arith.constant 0 : i32
    %c0_i32_0 = arith.constant 0 : i32
    %c0_i32_1 = arith.constant 0 : i32
    return %c0_i32, %c0_i32_0 : i32, i32
  }
  func.func @transform_2(%arg0: i32) -> (i32, i32) {
    %c0_i32 = arith.constant 0 : i32
    %c0_i32_0 = arith.constant 0 : i32
    return %arg0, %c0_i32 : i32, i32
  }
}

</mosaic_0001>

<llo_original>
// kernel: tpu_custom_call.1
$region0: #{tpu_custom_call.1}
  #allocation0 [shape = 'u32[]', space=smem, size = 0x4, offset = 0x4, fixed_abs, tag = 'smem constant byte address 0x4 - core index']
  #allocation1 [shape = 'u32[144,128]{1,0:T(1,128)}', space=vmem, size = 0x12000, scoped, tag = 'internal scratch']
  %s0 = inlined_call_operand.vmem [shape: s32[8,4], index: 0, kind: input, shape index: {}]
  %s1 = inlined_call_operand.hbm [shape: f32[512,128], index: 1, kind: input, shape index: {}]
  %s2 = inlined_call_operand.hbm [shape: f32[8,128], index: 2, kind: output, shape index: {}]
  %s3 = sld [smem:[#allocation0]]
  $region22: #{tpu_custom_call.1} parent=0
    _
  %s5 = ssub.s32 1, %s3
  %s6 = scalar_select 0, %s5, %s3
  $region1: #{tpu_custom_call.1} parent=0
    #allocation2 [shape = 'u8[262144]{0}', space=vmem, size = 0x40000, scoped, tag = 'input window, operand 1, single buffered']
    #allocation3 [shape = 's32[1]{0}', space=sflag, size = 0x4, scoped, tag = 'scoped memory for tpu_custom_call.1']
    #allocation4 [shape = 's32[1]{0}', space=sflag, size = 0x4, scoped, tag = 'scoped memory for tpu_custom_call.1']
    #allocation5 [shape = 'u8[4096]{0}', space=vmem, size = 0x1000, scoped, tag = 'output window, operand 0, single buffered']
    %7 = vsyncpa [#allocation3], 0
    %8 = vsyncpa [#allocation4], 0
    // Predicated region
    $region2: #{tpu_custom_call.1} parent=1 // pred_check
      _
    $region3: #{tpu_custom_call.1} parent=1 // pred_check_branch
      %10 = sbr.rel (0) target = $region5
    $region4: #{tpu_custom_call.1} parent=1 // pred_region
      _
    $region5: #{tpu_custom_call.1} parent=1 // pred_fallthru
      _
    // Predicated region
    $region6: #{tpu_custom_call.1} parent=1 // pred_check
      _
    $region7: #{tpu_custom_call.1} parent=1 // pred_check_branch
      %12 = sbr.rel (0) target = $region9
    $region8: #{tpu_custom_call.1} parent=1 // pred_region
      %s14 = ssub.s32 8192, 8192
      %15 = vsyncadd [#allocation3], %s14
      %s16 = sshll.u32 [#allocation2], 4
      %s17 = int_to_ptr.vmem [resolvable:$true] %s16
      %22 = dma.hbm_to_vmem [thread:$0]  %s1, 8192, %s17, [#allocation3], 128, 128, 8
    $region9: #{tpu_custom_call.1} parent=1 // pred_fallthru
      _
    // Predicated region
    $region10: #{tpu_custom_call.1} parent=1 // pred_check
      _
    $region11: #{tpu_custom_call.1} parent=1 // pred_check_branch
      %24 = sbr.rel (0) target = $region13
    $region12: #{tpu_custom_call.1} parent=1 // pred_region
      %25 = dma.done [#allocation3], 8192
    $region13: #{tpu_custom_call.1} parent=1 // pred_fallthru
      _
    %v26 = vld [vmem:[#allocation2] sm:$0xff]
    %v27 = vld [vmem:[#allocation2 + $0x8] sm:$0xff]
    %v28 = vld [vmem:[#allocation2 + $0x10] sm:$0xff]
    %v29 = vld [vmem:[#allocation2 + $0x18] sm:$0xff]
    %v30 = vld [vmem:[#allocation2 + $0x20] sm:$0xff]
    %v31 = vld [vmem:[#allocation2 + $0x28] sm:$0xff]
    %v32 = vld [vmem:[#allocation2 + $0x30] sm:$0xff]
    %v33 = vld [vmem:[#allocation2 + $0x38] sm:$0xff]
    %v34 = vld [vmem:[#allocation2 + $0x40] sm:$0xff]
    %v35 = vld [vmem:[#allocation2 + $0x48] sm:$0xff]
    %v36 = vld [vmem:[#allocation2 + $0x50] sm:$0xff]
    %v37 = vld [vmem:[#allocation2 + $0x58] sm:$0xff]
    %v38 = vld [vmem:[#allocation2 + $0x60] sm:$0xff]
    %v39 = vld [vmem:[#allocation2 + $0x68] sm:$0xff]
    %v40 = vld [vmem:[#allocation2 + $0x70] sm:$0xff]
    %v41 = vld [vmem:[#allocation2 + $0x78] sm:$0xff]
    %v42 = vld [vmem:[#allocation2 + $0x80] sm:$0xff]
    %v43 = vld [vmem:[#allocation2 + $0x88] sm:$0xff]
    %v44 = vld [vmem:[#allocation2 + $0x90] sm:$0xff]
    %v45 = vld [vmem:[#allocation2 + $0x98] sm:$0xff]
    %v46 = vld [vmem:[#allocation2 + $0xa0] sm:$0xff]
    %v47 = vld [vmem:[#allocation2 + $0xa8] sm:$0xff]
    %v48 = vld [vmem:[#allocation2 + $0xb0] sm:$0xff]
    %v49 = vld [vmem:[#allocation2 + $0xb8] sm:$0xff]
    %v50 = vld [vmem:[#allocation2 + $0xc0] sm:$0xff]
    %v51 = vld [vmem:[#allocation2 + $0xc8] sm:$0xff]
    %v52 = vld [vmem:[#allocation2 + $0xd0] sm:$0xff]
    %v53 = vld [vmem:[#allocation2 + $0xd8] sm:$0xff]
    %v54 = vld [vmem:[#allocation2 + $0xe0] sm:$0xff]
    %v55 = vld [vmem:[#allocation2 + $0xe8] sm:$0xff]
    %v56 = vld [vmem:[#allocation2 + $0xf0] sm:$0xff]
    %v57 = vld [vmem:[#allocation2 + $0xf8] sm:$0xff]
    %v58 = vld [vmem:[#allocation2 + $0x100] sm:$0xff]
    %v59 = vld [vmem:[#allocation2 + $0x108] sm:$0xff]
    %v60 = vld [vmem:[#allocation2 + $0x110] sm:$0xff]
    %v61 = vld [vmem:[#allocation2 + $0x118] sm:$0xff]
    %v62 = vld [vmem:[#allocation2 + $0x120] sm:$0xff]
    %v63 = vld [vmem:[#allocation2 + $0x128] sm:$0xff]
    %v64 = vld [vmem:[#allocation2 + $0x130] sm:$0xff]
    %v65 = vld [vmem:[#allocation2 + $0x138] sm:$0xff]
    %v66 = vld [vmem:[#allocation2 + $0x140] sm:$0xff]
    %v67 = vld [vmem:[#allocation2 + $0x148] sm:$0xff]
    %v68 = vld [vmem:[#allocation2 + $0x150] sm:$0xff]
    %v69 = vld [vmem:[#allocation2 + $0x158] sm:$0xff]
    %v70 = vld [vmem:[#allocation2 + $0x160] sm:$0xff]
    %v71 = vld [vmem:[#allocation2 + $0x168] sm:$0xff]
    %v72 = vld [vmem:[#allocation2 + $0x170] sm:$0xff]
    %v73 = vld [vmem:[#allocation2 + $0x178] sm:$0xff]
    %v74 = vld [vmem:[#allocation2 + $0x180] sm:$0xff]
    %v75 = vld [vmem:[#allocation2 + $0x188] sm:$0xff]
    %v76 = vld [vmem:[#allocation2 + $0x190] sm:$0xff]
    %v77 = vld [vmem:[#allocation2 + $0x198] sm:$0xff]
    %v78 = vld [vmem:[#allocation2 + $0x1a0] sm:$0xff]
    %v79 = vld [vmem:[#allocation2 + $0x1a8] sm:$0xff]
    %v80 = vld [vmem:[#allocation2 + $0x1b0] sm:$0xff]
    %v81 = vld [vmem:[#allocation2 + $0x1b8] sm:$0xff]
    %v82 = vld [vmem:[#allocation2 + $0x1c0] sm:$0xff]
    %v83 = vld [vmem:[#allocation2 + $0x1c8] sm:$0xff]
    %v84 = vld [vmem:[#allocation2 + $0x1d0] sm:$0xff]
    %v85 = vld [vmem:[#allocation2 + $0x1d8] sm:$0xff]
    %v86 = vld [vmem:[#allocation2 + $0x1e0] sm:$0xff]
    %v87 = vld [vmem:[#allocation2 + $0x1e8] sm:$0xff]
    %v88 = vld [vmem:[#allocation2 + $0x1f0] sm:$0xff]
    %v89 = vld [vmem:[#allocation2 + $0x1f8] sm:$0xff]
    %v90 = vlaneseq
    %v91 = vand.u32 %v90, 127
    %v92 = vld [vmem:[%s0] sm:$0xff]
    %93 = vset.pattern.permute.xlu0 0
    %94 = vperm.xlu0 %93, %v92
    %v95 = vpop.permute.xlu0 %94
    %vm96 = vcmp.eq.s32.totalorder %v95, %v91
    %v97 = vsel %vm96, 1, 0
    %v98 = vcvt.s32.f32 %v97
    %99 = vset.pattern.permute.xlu0 1
    %100 = vperm.xlu0 %99, %v92
    %v101 = vpop.permute.xlu0 %100
    %vm102 = vcmp.eq.s32.totalorder %v101, %v91
    %v103 = vsel %vm102, 1, 0
    %v104 = vcvt.s32.f32 %v103
    %105 = vset.pattern.permute.xlu0 2
    %106 = vperm.xlu0 %105, %v92
    %v107 = vpop.permute.xlu0 %106
    %vm108 = vcmp.eq.s32.totalorder %v107, %v91
    %v109 = vsel %vm108, 1, 0
    %v110 = vcvt.s32.f32 %v109
    %111 = vset.pattern.permute.xlu0 3
    %112 = vperm.xlu0 %111, %v92
    %v113 = vpop.permute.xlu0 %112
    %vm114 = vcmp.eq.s32.totalorder %v113, %v91
    %v115 = vsel %vm114, 1, 0
    %v116 = vcvt.s32.f32 %v115
    %117 = vmatprep.subr.mxu0 0.0
    %118 = vmatpush1.msra.mxu0 %v26
    %119 = vmatprep.subr.mxu0 0.0
    %120 = vmatpush1.msra.mxu0 %v27
    %121 = vmatprep.subr.mxu0 0.0
    %122 = vmatpush1.msra.mxu0 %v28
    %123 = vmatprep.subr.mxu0 0.0
    %124 = vmatpush1.msra.mxu0 %v29
    %125 = vmatprep.subr.mxu0 0.0
    %126 = vmatpush1.msra.mxu0 %v30
    %127 = vmatprep.subr.mxu0 0.0
    %128 = vmatpush1.msra.mxu0 %v31
    %129 = vmatprep.subr.mxu0 0.0
    %130 = vmatpush1.msra.mxu0 %v32
    %131 = vmatprep.subr.mxu0 0.0
    %132 = vmatpush1.msra.mxu0 %v33
    %133 = vmatprep.subr.mxu0 0.0
    %134 = vmatpush1.msra.mxu0 %v34
    %135 = vmatprep.subr.mxu0 0.0
    %136 = vmatpush1.msra.mxu0 %v35
    %137 = vmatprep.subr.mxu0 0.0
    %138 = vmatpush1.msra.mxu0 %v36
    %139 = vmatprep.subr.mxu0 0.0
    %140 = vmatpush1.msra.mxu0 %v37
    %141 = vmatprep.subr.mxu0 0.0
    %142 = vmatpush1.msra.mxu0 %v38
    %143 = vmatprep.subr.mxu0 0.0
    %144 = vmatpush1.msra.mxu0 %v39
    %145 = vmatprep.subr.mxu0 0.0
    %146 = vmatpush1.msra.mxu0 %v40
    %147 = vmatprep.subr.mxu0 0.0
    %148 = vmatpush1.msra.mxu0 %v41
    %149 = vmatprep.subr.mxu0 0.0
    %150 = vmatpush1.msra.mxu0 %v42
    %151 = vmatprep.subr.mxu0 0.0
    %152 = vmatpush1.msra.mxu0 %v43
    %153 = vmatprep.subr.mxu0 0.0
    %154 = vmatpush1.msra.mxu0 %v44
    %155 = vmatprep.subr.mxu0 0.0
    %156 = vmatpush1.msra.mxu0 %v45
    %157 = vmatprep.subr.mxu0 0.0
    %158 = vmatpush1.msra.mxu0 %v46
    %159 = vmatprep.subr.mxu0 0.0
    %160 = vmatpush1.msra.mxu0 %v47
    %161 = vmatprep.subr.mxu0 0.0
    %162 = vmatpush1.msra.mxu0 %v48
    %163 = vmatprep.subr.mxu0 0.0
    %164 = vmatpush1.msra.mxu0 %v49
    %165 = vmatprep.subr.mxu0 0.0
    %166 = vmatpush1.msra.mxu0 %v50
    %167 = vmatprep.subr.mxu0 0.0
    %168 = vmatpush1.msra.mxu0 %v51
    %169 = vmatprep.subr.mxu0 0.0
    %170 = vmatpush1.msra.mxu0 %v52
    %171 = vmatprep.subr.mxu0 0.0
    %172 = vmatpush1.msra.mxu0 %v53
    %173 = vmatprep.subr.mxu0 0.0
    %174 = vmatpush1.msra.mxu0 %v54
    %175 = vmatprep.subr.mxu0 0.0
    %176 = vmatpush1.msra.mxu0 %v55
    %177 = vmatprep.subr.mxu0 0.0
    %178 = vmatpush1.msra.mxu0 %v56
    %179 = vmatprep.subr.mxu0 0.0
    %180 = vmatpush1.msra.mxu0 %v57
    %181 = vmatprep.mubr.f32.mxu0 %v104
    %182 = vmatmul.mubr.f32.gmra.mrb[0].mxu0 %v98
    %v183 = vpop.f32.mrb[0].mxu0
    %v184 = vadd.f32 0.0, %v183
    %v185 = vpop.f32.mrb[0].mxu0
    %186 = vdwg.mxu0
    %187 = vmatprep.subr.mxu0 0.0
    %188 = vmatpush1.msra.mxu0 %v58
    %189 = vmatprep.subr.mxu0 0.0
    %190 = vmatpush1.msra.mxu0 %v59
    %191 = vmatprep.subr.mxu0 0.0
    %192 = vmatpush1.msra.mxu0 %v60
    %193 = vmatprep.subr.mxu0 0.0
    %194 = vmatpush1.msra.mxu0 %v61
    %195 = vmatprep.subr.mxu0 0.0
    %196 = vmatpush1.msra.mxu0 %v62
    %197 = vmatprep.subr.mxu0 0.0
    %198 = vmatpush1.msra.mxu0 %v63
    %199 = vmatprep.subr.mxu0 0.0
    %200 = vmatpush1.msra.mxu0 %v64
    %201 = vmatprep.subr.mxu0 0.0
    %202 = vmatpush1.msra.mxu0 %v65
    %203 = vmatprep.subr.mxu0 0.0
    %204 = vmatpush1.msra.mxu0 %v66
    %205 = vmatprep.subr.mxu0 0.0
    %206 = vmatpush1.msra.mxu0 %v67
    %207 = vmatprep.subr.mxu0 0.0
    %208 = vmatpush1.msra.mxu0 %v68
    %209 = vmatprep.subr.mxu0 0.0
    %210 = vmatpush1.msra.mxu0 %v69
    %211 = vmatprep.subr.mxu0 0.0
    %212 = vmatpush1.msra.mxu0 %v70
    %213 = vmatprep.subr.mxu0 0.0
    %214 = vmatpush1.msra.mxu0 %v71
    %215 = vmatprep.subr.mxu0 0.0
    %216 = vmatpush1.msra.mxu0 %v72
    %217 = vmatprep.subr.mxu0 0.0
    %218 = vmatpush1.msra.mxu0 %v73
    %219 = vmatprep.subr.mxu0 0.0
    %220 = vmatpush1.msra.mxu0 %v74
    %221 = vmatprep.subr.mxu0 0.0
    %222 = vmatpush1.msra.mxu0 %v75
    %223 = vmatprep.subr.mxu0 0.0
    %224 = vmatpush1.msra.mxu0 %v76
    %225 = vmatprep.subr.mxu0 0.0
    %226 = vmatpush1.msra.mxu0 %v77
    %227 = vmatprep.subr.mxu0 0.0
    %228 = vmatpush1.msra.mxu0 %v78
    %229 = vmatprep.subr.mxu0 0.0
    %230 = vmatpush1.msra.mxu0 %v79
    %231 = vmatprep.subr.mxu0 0.0
    %232 = vmatpush1.msra.mxu0 %v80
    %233 = vmatprep.subr.mxu0 0.0
    %234 = vmatpush1.msra.mxu0 %v81
    %235 = vmatprep.subr.mxu0 0.0
    %236 = vmatpush1.msra.mxu0 %v82
    %237 = vmatprep.subr.mxu0 0.0
    %238 = vmatpush1.msra.mxu0 %v83
    %239 = vmatprep.subr.mxu0 0.0
    %240 = vmatpush1.msra.mxu0 %v84
    %241 = vmatprep.subr.mxu0 0.0
    %242 = vmatpush1.msra.mxu0 %v85
    %243 = vmatprep.subr.mxu0 0.0
    %244 = vmatpush1.msra.mxu0 %v86
    %245 = vmatprep.subr.mxu0 0.0
    %246 = vmatpush1.msra.mxu0 %v87
    %247 = vmatprep.subr.mxu0 0.0
    %248 = vmatpush1.msra.mxu0 %v88
    %249 = vmatprep.subr.mxu0 0.0
    %250 = vmatpush1.msra.mxu0 %v89
    %251 = vmatprep.mubr.f32.mxu0 %v116
    %252 = vmatmul.mubr.f32.gmra.mrb[0].mxu0 %v110
    %v253 = vpop.f32.mrb[0].mxu0
    %v254 = vadd.f32 %v184, %v253
    %v255 = vpop.f32.mrb[0].mxu0
    %256 = vdwg.mxu0
    %257 = vst [vmem:[#allocation5] sm:$0xff] %v254
    // Predicated region
    $region14: #{tpu_custom_call.1} parent=1 // pred_check
      _
    $region15: #{tpu_custom_call.1} parent=1 // pred_check_branch
      %259 = sbr.rel (0) target = $region17
    $region16: #{tpu_custom_call.1} parent=1 // pred_region
      %s261 = ssub.s32 128, 128
      %262 = vsyncadd [#allocation4], %s261
      %s264 = sshll.u32 [#allocation5], 4
      %s265 = int_to_ptr.vmem [resolvable:$true] %s264
      %267 = dma.vmem_to_hbm [thread:$0]  %s265, 128, %s2, [#allocation4]
    $region17: #{tpu_custom_call.1} parent=1 // pred_fallthru
      _
    // Predicated region
    $region18: #{tpu_custom_call.1} parent=1 // pred_check
      _
    $region19: #{tpu_custom_call.1} parent=1 // pred_check_branch
      %269 = sbr.rel (0) target = $region21
    $region20: #{tpu_custom_call.1} parent=1 // pred_region
      %270 = dma.done [#allocation4], 128
    $region21: #{tpu_custom_call.1} parent=1 // pred_fallthru
      _
    %271 = vsyncpa [#allocation3], 1
    %272 = vsyncpa [#allocation4], 1

</llo_original>
